<compile_context>
chip_gen: v6e
topology: v6e:2x2x1
jax: 0.10.0
libtpu: 0.0.40
codegen_flags: <defaults>
</compile_context>

<pallas_src>
import functools

import jax
import jax.numpy as jnp
from jax.experimental import pallas as pl
from jax.experimental.pallas import tpu as pltpu

NEG_SLOPE = 0.2          # LeakyReLU negative slope used by GATLayer
MASK_FILL = -1e30        # f32 sentinel for non-edges
LANE = 128               # per-head / output lane padding


# ----------------------------- in-kernel helpers -----------------------------
def _attend_one_head(edge, s_dst_col, s_src_row, z_blk):
    """Masked softmax over src + aggregation for one head.

    edge:      (T, N) bool     adjacency (dst rows, src lanes)
    s_dst_col: (T, 1) f32      a_dst . z_dst for this tile's rows
    s_src_row: (1, N) f32      a_src . z_src for all nodes (pre-transposed)
    z_blk:     (N, 128) bf16   projected src features (lane-padded)
    returns    (T, 128) f32
    """
    e = s_dst_col + s_src_row                                  # (T, N) VPU broadcast add
    e = jnp.where(e >= 0.0, e, NEG_SLOPE * e)                  # LeakyReLU
    e = jnp.where(edge, e, MASK_FILL)                          # mask non-edges
    m = jnp.max(e, axis=-1, keepdims=True)                     # lane reduce (XLU)
    p = jnp.exp(e - m)                                         # EUP; masked lanes -> exactly 0
    denom = jnp.sum(p, axis=-1, keepdims=True)                 # >= 1 when row has an edge
    # row guard: dst rows with no incoming edge -> zeros (reference would be NaN)
    inv = jnp.where(m > jnp.float32(-1e20),
                    pl.reciprocal(denom, approx=True),
                    jnp.float32(0.0))                          # (T, 1)
    agg = jnp.dot(p.astype(jnp.bfloat16), z_blk,
                  preferred_element_type=jnp.float32)          # (T, 128) MXU, bf16 x bf16
    return agg * inv                                           # normalize the F-wide output


# --------------------------------- kernels -----------------------------------
def _proj1_kernel(h_ref, wpad_ref, wscore_ref, z_ref, sdst_ref, ssrcT_ref, *, num_heads):
    """Layer-1 projection: z (bf16, lane-padded per head) + attention scores (f32)."""
    h = h_ref[...]                                             # (T, F_in) f32
    z = jnp.dot(h.astype(jnp.bfloat16), wpad_ref[...],
                preferred_element_type=jnp.float32)            # (T, H*128)
    z_ref[...] = z.astype(jnp.bfloat16)
    # tiny f32 score matmul keeps the exp path accurate
    scores = jnp.dot(h, wscore_ref[...], preferred_element_type=jnp.float32)  # (T, 2H)
    sdst_ref[...] = scores[:, num_heads:]                      # (T, H)
    ssrcT_ref[...] = jnp.transpose(scores[:, :num_heads])      # (H, T): once per row tile


def _attend1_kernel(adjt_ref, z1_ref, ssrc1T_ref, sdst1_ref, w2pad_ref, w2score_ref,
                    z2_ref, sdst2_ref, ssrc2T_ref, *, num_heads):
    """Layer-1 attention (all heads) + ELU + fused layer-2 projection, per dst tile."""
    edge = adjt_ref[...] != 0                                  # int8 -> bool, once per tile
    sdst = sdst1_ref[...]                                      # (T, H) f32
    head_outs = []
    for hd in range(num_heads):                                # static unroll (small H)
        z_blk = z1_ref[:, hd * LANE:(hd + 1) * LANE]           # (N, 128) bf16, aligned free view
        head_outs.append(_attend_one_head(edge,
                                          sdst[:, hd:hd + 1],
                                          ssrc1T_ref[hd:hd + 1, :],
                                          z_blk))
    h1 = head_outs[0] if num_heads == 1 else jnp.concatenate(head_outs, axis=1)
    h1 = jax.nn.elu(h1)                                        # (T, H*128) f32

    # layer-2 projection is row-wise -> fuse it here (no extra pass over h1)
    z2 = jnp.dot(h1.astype(jnp.bfloat16), w2pad_ref[...],
                 preferred_element_type=jnp.float32)           # (T, 128)
    z2_ref[...] = z2.astype(jnp.bfloat16)
    s2 = jnp.dot(h1, w2score_ref[...], preferred_element_type=jnp.float32)   # (T, 2) f32
    sdst2_ref[...] = s2[:, 1:2]                                # (T, 1)
    ssrc2T_ref[...] = jnp.transpose(s2[:, 0:1])                # (1, T)


def _attend2_kernel(adjt_ref, z2_ref, ssrc2T_ref, sdst2_ref, out_ref):
    """Layer-2 (single head) attention per dst tile."""
    edge = adjt_ref[...] != 0
    out_ref[...] = _attend_one_head(edge, sdst2_ref[...], ssrc2T_ref[...], z2_ref[...])


# ------------------------------ weight plumbing ------------------------------
def _build_layer1_weights(params):
    """[W_0 pad128 | W_1 pad128 | ...] (bf16) and [Wa_src_0.. | Wa_dst_0..] (f32)."""
    w_pad = jnp.concatenate(
        [jnp.pad(w, ((0, 0), (0, LANE - w.shape[1]))) for (w, _, _) in params], axis=1)
    s_src = jnp.concatenate([w @ a_s for (w, a_s, _) in params], axis=1)
    s_dst = jnp.concatenate([w @ a_d for (w, _, a_d) in params], axis=1)
    w_score = jnp.concatenate([s_src, s_dst], axis=1)
    return w_pad.astype(jnp.bfloat16), w_score.astype(jnp.float32)


def _build_layer2_weights(params, num_heads, f_hid):
    """Re-lay layer-2 rows into the per-head 128-padded h1 layout; pad cols to 128."""
    w2, a_src, a_dst = params[0]
    f_out = w2.shape[1]

    def relay(mat):  # (num_heads*f_hid, c) -> (num_heads*LANE, c)
        blocks = [jnp.pad(mat[hd * f_hid:(hd + 1) * f_hid], ((0, LANE - f_hid), (0, 0)))
                  for hd in range(num_heads)]
        return jnp.concatenate(blocks, axis=0)

    w2_pad = jnp.pad(relay(w2), ((0, 0), (0, LANE - f_out))).astype(jnp.bfloat16)
    w2_score = relay(jnp.concatenate([w2 @ a_src, w2 @ a_dst], axis=1)).astype(jnp.float32)
    return w2_pad, w2_score


def _cparams(approx_block_bytes):
    # double-buffered blocks + headroom for in-kernel f32 temporaries (e, p, h1, ...)
    limit = 2 * int(approx_block_bytes) + (16 << 20)
    return pltpu.CompilerParams(
        dimension_semantics=("parallel",),               # dst tiles independent -> 2 TCs on v7x
        vmem_limit_bytes=min(limit, 64 << 20))           # 64 MiB = v7x per-core physical VMEM


# --------------------------------- wrapper ------------------------------------
def gat_model(h, layer1_params, layer2_params, adj_ds):
    """layerX_params: list of (W, a_src, a_dst) per head.
    adj_ds[j, i] = 1 iff there is an edge src i -> dst j (already [dst, src])."""
    n, f_in = h.shape
    num_heads = len(layer1_params)
    f_hid = layer1_params[0][0].shape[1]
    f_out = layer2_params[0][0].shape[1]
    assert f_hid <= LANE and f_out <= LANE and len(layer2_params) == 1
    hf = num_heads * LANE

    # dst tile size: 128 when it divides N, else one full tile (block = full dim is legal)
    tile = LANE if n % LANE == 0 else n
    n_tiles = n // tile

    w1_pad, w1_score = _build_layer1_weights(layer1_params)   # (F_in, H*128) bf16, (F_in, 2H) f32
    w2_pad, w2_score = _build_layer2_weights(layer2_params, num_heads, f_hid)

    h = h.astype(jnp.float32)
    adj_ds = adj_ds.astype(jnp.int8)                          # int8 stream: 4x less DMA/VMEM

    # ---- proj1: z1 (bf16, padded) + scores for all nodes, row-tiled --------------
    proj_bytes = (tile * f_in * 4 + f_in * hf * 2 + f_in * 2 * num_heads * 4
                  + tile * hf * 2 + tile * num_heads * 4 + num_heads * tile * 4)
    z1_pad, s_dst1, s_src1T = pl.pallas_call(
        functools.partial(_proj1_kernel, num_heads=num_heads),
        grid=(n_tiles,),
        in_specs=[pl.BlockSpec((tile, f_in), lambda i: (i, 0)),
                  pl.BlockSpec((f_in, hf), lambda i: (0, 0)),
                  pl.BlockSpec((f_in, 2 * num_heads), lambda i: (0, 0))],
        out_specs=[pl.BlockSpec((tile, hf), lambda i: (i, 0)),
                   pl.BlockSpec((tile, num_heads), lambda i: (i, 0)),
                   pl.BlockSpec((num_heads, tile), lambda i: (0, i))],
        out_shape=[jax.ShapeDtypeStruct((n, hf), jnp.bfloat16),
                   jax.ShapeDtypeStruct((n, num_heads), jnp.float32),
                   jax.ShapeDtypeStruct((num_heads, n), jnp.float32)],
        compiler_params=_cparams(proj_bytes),
    )(h, w1_pad, w1_score)

    # ---- attend1 + ELU + proj2: dst-tiled, adjacency streamed, z1/W resident -----
    att1_bytes = (tile * n * 1 + n * hf * 2 + num_heads * n * 4 + tile * num_heads * 4
                  + hf * LANE * 2 + hf * 2 * 4
                  + tile * LANE * 2 + tile * 4 + tile * 4
                  + (num_heads + 2) * tile * n * 4)            # e/p temporaries
    z2_pad, s_dst2, s_src2T = pl.pallas_call(
        functools.partial(_attend1_kernel, num_heads=num_heads),
        grid=(n_tiles,),
        in_specs=[pl.BlockSpec((tile, n), lambda i: (i, 0)),          # adjacency (int8) streamed
                  pl.BlockSpec((n, hf), lambda i: (0, 0)),            # z1 resident
                  pl.BlockSpec((num_heads, n), lambda i: (0, 0)),     # s_src1^T resident
                  pl.BlockSpec((tile, num_heads), lambda i: (i, 0)),  # s_dst1 tiled
                  pl.BlockSpec((hf, LANE), lambda i: (0, 0)),         # W2 resident
                  pl.BlockSpec((hf, 2), lambda i: (0, 0))],           # W2 score resident
        out_specs=[pl.BlockSpec((tile, LANE), lambda i: (i, 0)),
                   pl.BlockSpec((tile, 1), lambda i: (i, 0)),
                   pl.BlockSpec((1, tile), lambda i: (0, i))],
        out_shape=[jax.ShapeDtypeStruct((n, LANE), jnp.bfloat16),
                   jax.ShapeDtypeStruct((n, 1), jnp.float32),
                   jax.ShapeDtypeStruct((1, n), jnp.float32)],
        compiler_params=_cparams(att1_bytes),
    )(adj_ds, z1_pad, s_src1T, s_dst1, w2_pad, w2_score)

    # ---- attend2: layer-2 attention, dst-tiled ------------------------------------
    att2_bytes = (tile * n * 1 + n * LANE * 2 + n * 4 + tile * 4
                  + tile * LANE * 4 + 3 * tile * n * 4)
    out_pad = pl.pallas_call(
        _attend2_kernel,
        grid=(n_tiles,),
        in_specs=[pl.BlockSpec((tile, n), lambda i: (i, 0)),
                  pl.BlockSpec((n, LANE), lambda i: (0, 0)),
                  pl.BlockSpec((1, n), lambda i: (0, 0)),
                  pl.BlockSpec((tile, 1), lambda i: (i, 0))],
        out_specs=pl.BlockSpec((tile, LANE), lambda i: (i, 0)),       # lane-dense padded output
        out_shape=jax.ShapeDtypeStruct((n, LANE), jnp.float32),
        compiler_params=_cparams(att2_bytes),
    )(adj_ds, z2_pad, s_src2T, s_dst2)

    return out_pad[:, :f_out]                                  # wrapper slices the padding off


# ----------------------------- pure-JAX reference -----------------------------
def _ref_head(x, w, a_src, a_dst, adj_ds):
    z = x @ w
    e = (z @ a_dst) + (z @ a_src).T                            # e[dst, src]
    e = jnp.where(e >= 0, e, NEG_SLOPE * e)
    e = jnp.where(adj_ds > 0, e, -jnp.inf)
    alpha = jax.nn.softmax(e, axis=-1)                         # softmax over incoming edges
    return alpha @ z


def _ref_model(x, l1, l2, adj_ds):
    x = jnp.concatenate([_ref_head(x, *p, adj_ds) for p in l1], axis=1)
    x = jax.nn.elu(x)
    return jnp.concatenate([_ref_head(x, *p, adj_ds) for p in l2], axis=1)


# --------------------------------- main ---------------------------------------
def _init_head_params(key, in_dim, out_dim):
    kw, ka = jax.random.split(key)
    # nn.Linear(in_dim, out_dim, bias=False): weight (out_dim, in_dim) -> use W^T
    w = jax.random.normal(kw, (in_dim, out_dim), jnp.float32) / jnp.sqrt(in_dim)
    # nn.Linear(2*out_dim, 1, bias=False): weight (1, 2*out_dim)
    a = jax.random.normal(ka, (2 * out_dim,), jnp.float32) / jnp.sqrt(2 * out_dim)
    return w, a[:out_dim].reshape(out_dim, 1), a[out_dim:].reshape(out_dim, 1)


if __name__ == "__main__":
    N = 256          # number of graph nodes (2 dst tiles of 128)
    in_dim = 32
    hidden_dim = 16
    out_dim = 8
    num_heads = 2

    key = jax.random.PRNGKey(0)
    k_feat, k_adj, k_l1, k_l2 = jax.random.split(key, 4)

    # node features
    h = jax.random.normal(k_feat, (N, in_dim), jnp.float32)

    # adjacency produced directly in [dst, src] orientation (no host transpose),
    # stored as int8; self-loops guarantee every node has >= 1 incoming edge.
    adj_ds = jax.random.bernoulli(k_adj, 0.15, (N, N))
    adj_ds = jnp.logical_or(adj_ds, jnp.eye(N, dtype=bool)).astype(jnp.int8)

    # layer 1: num_heads heads, in_dim -> hidden_dim each
    l1_keys = jax.random.split(k_l1, num_heads)
    layer1_params = [_init_head_params(k, in_dim, hidden_dim) for k in l1_keys]
    # layer 2: 1 head, hidden_dim * num_heads -> out_dim
    layer2_params = [_init_head_params(k_l2, hidden_dim * num_heads, out_dim)]

    out = gat_model(h, layer1_params, layer2_params, adj_ds)
    out = jax.block_until_ready(out)

    ref = _ref_model(h, layer1_params, layer2_params, adj_ds)
    assert out.shape == (N, out_dim)
    # bf16 MXU operands (per perf guidance) vs the f32 reference -> loosened
    # tolerance; typical max-abs error here is ~1e-2.
    assert jnp.allclose(out, ref, atol=1e-1, rtol=1e-1), "mismatch vs JAX reference"

    print("KERNEL_OK")
</pallas_src>

<mosaic_0001>
module attributes {stable_mosaic.version = 11 : i64} {
  func.func @_proj1_kernel(%arg0: i32, %arg1: memref<128x32xf32, #tpu.memory_space<vmem>>, %arg2: memref<32x256xbf16, #tpu.memory_space<vmem>>, %arg3: memref<32x4xf32, #tpu.memory_space<vmem>>, %arg4: memref<128x256xbf16, #tpu.memory_space<vmem>>, %arg5: memref<128x2xf32, #tpu.memory_space<vmem>>, %arg6: memref<2x128xf32, #tpu.memory_space<vmem>>) attributes {dimension_semantics = [#tpu.dimension_semantics<parallel>], iteration_bounds = array<i64: 2>, scalar_prefetch = 0 : i64, scratch_operands = 0 : i64, tpu.core_type = #tpu.core_type<tc>, window_params = [{transform_indices = @transform_0, window_bounds = array<i64: 128, 32>}, {pipeline_mode = #tpu.pipeline_mode<synchronous>, transform_indices = @transform_1, window_bounds = array<i64: 32, 256>}, {pipeline_mode = #tpu.pipeline_mode<synchronous>, transform_indices = @transform_2, window_bounds = array<i64: 32, 4>}, {transform_indices = @transform_3, window_bounds = array<i64: 128, 256>}, {transform_indices = @transform_4, window_bounds = array<i64: 128, 2>}, {transform_indices = @transform_5, window_bounds = array<i64: 2, 128>}]} {
    %c0 = arith.constant 0 : index
    %c0_0 = arith.constant 0 : index
    %0 = vector.load %arg1[%c0, %c0_0] : memref<128x32xf32, #tpu.memory_space<vmem>>, vector<128x32xf32>
    %1 = arith.truncf %0 : vector<128x32xf32> to vector<128x32xbf16>
    %c0_1 = arith.constant 0 : index
    %c0_2 = arith.constant 0 : index
    %2 = vector.load %arg2[%c0_1, %c0_2] : memref<32x256xbf16, #tpu.memory_space<vmem>>, vector<32x256xbf16>
    %cst = arith.constant dense<0.000000e+00> : vector<128x256xf32>
    %3 = tpu.matmul %1, %2, %cst {dimension_numbers = #tpu.dot_dimension_numbers<[1], [0], [0], [1], [0, 0, 1, 1], [], []>} : vector<128x32xbf16>, vector<32x256xbf16>, vector<128x256xf32> -> vector<128x256xf32>
    %4 = arith.truncf %3 : vector<128x256xf32> to vector<128x256xbf16>
    %c0_3 = arith.constant 0 : index
    %c0_4 = arith.constant 0 : index
    %5 = vector.load %arg4[%c0_3, %c0_4] : memref<128x256xbf16, #tpu.memory_space<vmem>>, vector<128x256xbf16>
    tpu.vector_store %arg4[%c0_3, %c0_4], %4 {strides = array<i32>} : memref<128x256xbf16, #tpu.memory_space<vmem>>, vector<128x256xbf16>,
    %c0_5 = arith.constant 0 : index
    %c0_6 = arith.constant 0 : index
    %6 = vector.load %arg3[%c0_5, %c0_6] : memref<32x4xf32, #tpu.memory_space<vmem>>, vector<32x4xf32>
    %cst_7 = arith.constant dense<0.000000e+00> : vector<128x4xf32>
    %7 = tpu.matmul %0, %6, %cst_7 {dimension_numbers = #tpu.dot_dimension_numbers<[1], [0], [0], [1], [0, 0, 1, 1], [], []>} : vector<128x32xf32>, vector<32x4xf32>, vector<128x4xf32> -> vector<128x4xf32>
    %8 = vector.extract_strided_slice %7 {offsets = [0, 2], sizes = [128, 2], strides = [1, 1]} : vector<128x4xf32> to vector<128x2xf32>
    %c0_8 = arith.constant 0 : index
    %c0_9 = arith.constant 0 : index
    %9 = vector.load %arg5[%c0_8, %c0_9] : memref<128x2xf32, #tpu.memory_space<vmem>>, vector<128x2xf32>
    tpu.vector_store %arg5[%c0_8, %c0_9], %8 {strides = array<i32>} : memref<128x2xf32, #tpu.memory_space<vmem>>, vector<128x2xf32>,
    %10 = vector.extract_strided_slice %7 {offsets = [0, 0], sizes = [128, 2], strides = [1, 1]} : vector<128x4xf32> to vector<128x2xf32>
    %11 = tpu.transpose %10, [1, 0] : vector<128x2xf32> -> vector<2x128xf32>
    %c0_10 = arith.constant 0 : index
    %c0_11 = arith.constant 0 : index
    %12 = vector.load %arg6[%c0_10, %c0_11] : memref<2x128xf32, #tpu.memory_space<vmem>>, vector<2x128xf32>
    tpu.vector_store %arg6[%c0_10, %c0_11], %11 {strides = array<i32>} : memref<2x128xf32, #tpu.memory_space<vmem>>, vector<2x128xf32>,
    return
  }
  func.func @transform_0(%arg0: i32) -> (i32, i32) {
    %c0_i32 = arith.constant 0 : i32
    %c0_i32_0 = arith.constant 0 : i32
    return %arg0, %c0_i32 : i32, i32
  }
  func.func @transform_1(%arg0: i32) -> (i32, i32) {
    %c0_i32 = arith.constant 0 : i32
    %c0_i32_0 = arith.constant 0 : i32
    %c0_i32_1 = arith.constant 0 : i32
    return %c0_i32, %c0_i32_0 : i32, i32
  }
  func.func @transform_2(%arg0: i32) -> (i32, i32) {
    %c0_i32 = arith.constant 0 : i32
    %c0_i32_0 = arith.constant 0 : i32
    %c0_i32_1 = arith.constant 0 : i32
    return %c0_i32, %c0_i32_0 : i32, i32
  }
  func.func @transform_3(%arg0: i32) -> (i32, i32) {
    %c0_i32 = arith.constant 0 : i32
    %c0_i32_0 = arith.constant 0 : i32
    return %arg0, %c0_i32 : i32, i32
  }
  func.func @transform_4(%arg0: i32) -> (i32, i32) {
    %c0_i32 = arith.constant 0 : i32
    %c0_i32_0 = arith.constant 0 : i32
    return %arg0, %c0_i32 : i32, i32
  }
  func.func @transform_5(%arg0: i32) -> (i32, i32) {
    %c0_i32 = arith.constant 0 : i32
    %c0_i32_0 = arith.constant 0 : i32
    return %c0_i32, %arg0 : i32, i32
  }
}

</mosaic_0001>

<llo_original>
// kernel: tpu_custom_call.1
$region0: #{tpu_custom_call.1}
  #allocation0 [shape = 'u32[]', space=smem, size = 0x4, offset = 0x4, fixed_abs, tag = 'smem constant byte address 0x4 - core index']
  #allocation1 [shape = 'u32[144,128]{1,0:T(1,128)}', space=vmem, size = 0x12000, scoped, tag = 'internal scratch']
  %s0 = inlined_call_operand.vmem [shape: f32[256,32], index: 0, kind: input, shape index: {}]
  %s1 = inlined_call_operand.vmem [shape: bf16[32,256], index: 1, kind: input, shape index: {}]
  %s2 = inlined_call_operand.vmem [shape: f32[32,4], index: 2, kind: input, shape index: {}]
  %s3 = inlined_call_operand.hbm [shape: bf16[256,256], index: 3, kind: output, shape index: {0}]
  %s4 = inlined_call_operand.vmem [shape: f32[256,2], index: 4, kind: output, shape index: {1}]
  %s5 = inlined_call_operand.hbm [shape: f32[2,256], index: 5, kind: output, shape index: {2}]
  %6 = xla_tuple %s3, %s4, %s5
  %s7 = sld [smem:[#allocation0]]
  $region61: #{tpu_custom_call.1} parent=0
    _
  %s9 = ssub.s32 1, %s7
  %s10 = scalar_select 0, %s9, %s7
  $region1: #{tpu_custom_call.1} parent=0
    #allocation2 [shape = 'u8[131072]{0}', space=vmem, size = 0x20000, scoped, tag = 'output window, operand 0']
    #allocation3 [shape = 's32[2]{0}', space=sflag, size = 0x8, scoped, tag = 'scoped memory for tpu_custom_call.1']
    #allocation4 [shape = 'u8[2048]{0}', space=vmem, size = 0x800, scoped, tag = 'output window, operand 2']
    #allocation5 [shape = 's32[2]{0}', space=sflag, size = 0x8, scoped, tag = 'scoped memory for tpu_custom_call.1']
    %11 = vsyncpa [#allocation3], 0
    %s12 = scalar_lea.sflag [#allocation3], 1
    %13 = vsyncpa %s12, 0
    %14 = vsyncpa [#allocation5], 0
    %s15 = scalar_lea.sflag [#allocation5], 1
    %16 = vsyncpa %s15, 0
    loop: start=0, step=1, limit=4
    $region2: #{tpu_custom_call.1} parent=1 // loop_pre_header
      _
    $region3: #{tpu_custom_call.1} parent=1 // loop_header
      %s18 = sphi 0, %s22
      %p19 = scmp.ge.s32.totalorder %s18, 4
      %s28 = sphi 0, %s30
      %s31 = sphi 0, %s28
      %s32 = sphi 0, %s31
      %s48 = sphi 0, %s32
      %s52 = sphi 0, %s52
      %s54 = sphi 0, %s52
      %s55 = sphi 0, %s54
      %s69 = sphi 0, %s55
      %s73 = sphi 0, %s73
      %s75 = sphi 0, %s73
      %s76 = sphi 0, %s75
      %s90 = sphi 0, %s76
      %s96 = sphi 0, %s98
      %s99 = sphi 0, %s96
      %s100 = sphi 0, %s99
      %s116 = sphi 0, %s100
      %s122 = sphi 0, %s124
      %s125 = sphi 0, %s122
      %s126 = sphi 0, %s125
      %s142 = sphi 0, %s126
      %s148 = sphi 0, %s150
      %s151 = sphi 0, %s148
      %s152 = sphi 0, %s151
      %s168 = sphi 0, %s152
    $region4: #{tpu_custom_call.1} parent=1 // loop_header_branch
      %21 = sbr.rel (%p19) target = $region8
    $region5: #{tpu_custom_call.1} parent=1 // loop_body
      %s23 = ssub.s32 %s18, 1
      %s24 = ssub.s32 %s18, 2
      %s25 = sadd.s32 %s18, 1
      %s26 = ssub.s32 %s18, %s25
      %p27 = scmp.eq.s32.totalorder %s26, 0
      %s29 = sadd.s32 %s28, 1
      %s30 = scalar_select %p27, %s28, %s29
      %p33 = pneg %p27
      %p34 = scmp.eq.s32.totalorder %s18, 1
      %p35 = por %p33, %p34
      %p36 = scmp.ne.s32.totalorder %s28, %s31
      %p37 = scmp.eq.s32.totalorder %s18, 0
      %p38 = por %p36, %p37
      %p39 = scmp.ne.s32.totalorder %s28, %s31
      %p40 = scmp.eq.s32.totalorder %s23, 1
      %p41 = por %p39, %p40
      %p42 = scmp.ne.s32.totalorder %s31, %s32
      %p43 = scmp.eq.s32.totalorder %s23, 0
      %p44 = por %p42, %p43
      %p45 = scmp.ne.s32.totalorder %s31, %s32
      %p46 = scmp.eq.s32.totalorder %s24, 1
      %p47 = por %p45, %p46
      %p49 = scmp.ne.s32.totalorder %s32, %s48
      %p50 = scmp.eq.s32.totalorder %s24, 0
      %p51 = por %p49, %p50
      %s53 = sadd.s32 %s52, 1
      %p56 = scmp.eq.s32.totalorder %s18, 1
      %p57 = scmp.ne.s32.totalorder %s52, %s54
      %p58 = scmp.eq.s32.totalorder %s18, 0
      %p59 = por %p57, %p58
      %p60 = scmp.ne.s32.totalorder %s52, %s54
      %p61 = scmp.eq.s32.totalorder %s23, 1
      %p62 = por %p60, %p61
      %p63 = scmp.ne.s32.totalorder %s54, %s55
      %p64 = scmp.eq.s32.totalorder %s23, 0
      %p65 = por %p63, %p64
      %p66 = scmp.ne.s32.totalorder %s54, %s55
      %p67 = scmp.eq.s32.totalorder %s24, 1
      %p68 = por %p66, %p67
      %p70 = scmp.ne.s32.totalorder %s55, %s69
      %p71 = scmp.eq.s32.totalorder %s24, 0
      %p72 = por %p70, %p71
      %s74 = sadd.s32 %s73, 1
      %p77 = scmp.eq.s32.totalorder %s18, 1
      %p78 = scmp.ne.s32.totalorder %s73, %s75
      %p79 = scmp.eq.s32.totalorder %s18, 0
      %p80 = por %p78, %p79
      %p81 = scmp.ne.s32.totalorder %s73, %s75
      %p82 = scmp.eq.s32.totalorder %s23, 1
      %p83 = por %p81, %p82
      %p84 = scmp.ne.s32.totalorder %s75, %s76
      %p85 = scmp.eq.s32.totalorder %s23, 0
      %p86 = por %p84, %p85
      %p87 = scmp.ne.s32.totalorder %s75, %s76
      %p88 = scmp.eq.s32.totalorder %s24, 1
      %p89 = por %p87, %p88
      %p91 = scmp.ne.s32.totalorder %s76, %s90
      %p92 = scmp.eq.s32.totalorder %s24, 0
      %p93 = por %p91, %p92
      %s94 = ssub.s32 %s18, %s25
      %p95 = scmp.eq.s32.totalorder %s94, 0
      %s97 = sadd.s32 %s96, 1
      %s98 = scalar_select %p95, %s96, %s97
      %p101 = pneg %p95
      %p102 = scmp.eq.s32.totalorder %s18, 1
      %p103 = por %p101, %p102
      %p104 = scmp.ne.s32.totalorder %s96, %s99
      %p105 = scmp.eq.s32.totalorder %s18, 0
      %p106 = por %p104, %p105
      %p107 = scmp.ne.s32.totalorder %s96, %s99
      %p108 = scmp.eq.s32.totalorder %s23, 1
      %p109 = por %p107, %p108
      %p110 = scmp.ne.s32.totalorder %s99, %s100
      %p111 = scmp.eq.s32.totalorder %s23, 0
      %p112 = por %p110, %p111
      %p113 = scmp.ne.s32.totalorder %s99, %s100
      %p114 = scmp.eq.s32.totalorder %s24, 1
      %p115 = por %p113, %p114
      %p117 = scmp.ne.s32.totalorder %s100, %s116
      %p118 = scmp.eq.s32.totalorder %s24, 0
      %p119 = por %p117, %p118
      %s120 = ssub.s32 %s18, %s25
      %p121 = scmp.eq.s32.totalorder %s120, 0
      %s123 = sadd.s32 %s122, 1
      %s124 = scalar_select %p121, %s122, %s123
      %p127 = pneg %p121
      %p128 = scmp.eq.s32.totalorder %s18, 1
      %p129 = por %p127, %p128
      %p130 = scmp.ne.s32.totalorder %s122, %s125
      %p131 = scmp.eq.s32.totalorder %s18, 0
      %p132 = por %p130, %p131
      %p133 = scmp.ne.s32.totalorder %s122, %s125
      %p134 = scmp.eq.s32.totalorder %s23, 1
      %p135 = por %p133, %p134
      %p136 = scmp.ne.s32.totalorder %s125, %s126
      %p137 = scmp.eq.s32.totalorder %s23, 0
      %p138 = por %p136, %p137
      %p139 = scmp.ne.s32.totalorder %s125, %s126
      %p140 = scmp.eq.s32.totalorder %s24, 1
      %p141 = por %p139, %p140
      %p143 = scmp.ne.s32.totalorder %s126, %s142
      %p144 = scmp.eq.s32.totalorder %s24, 0
      %p145 = por %p143, %p144
      %s146 = ssub.s32 %s18, %s25
      %p147 = scmp.eq.s32.totalorder %s146, 0
      %s149 = sadd.s32 %s148, 1
      %s150 = scalar_select %p147, %s148, %s149
      %p153 = pneg %p147
      %p154 = scmp.eq.s32.totalorder %s18, 1
      %p155 = por %p153, %p154
      %p156 = scmp.ne.s32.totalorder %s148, %s151
      %p157 = scmp.eq.s32.totalorder %s18, 0
      %p158 = por %p156, %p157
      %p159 = scmp.ne.s32.totalorder %s148, %s151
      %p160 = scmp.eq.s32.totalorder %s23, 1
      %p161 = por %p159, %p160
      %p162 = scmp.ne.s32.totalorder %s151, %s152
      %p163 = scmp.eq.s32.totalorder %s23, 0
      %p164 = por %p162, %p163
      %p165 = scmp.ne.s32.totalorder %s151, %s152
      %p166 = scmp.eq.s32.totalorder %s24, 1
      %p167 = por %p165, %p166
      %p169 = scmp.ne.s32.totalorder %s152, %s168
      %p170 = scmp.eq.s32.totalorder %s24, 0
      %p171 = por %p169, %p170
      %p172 = scmp.le.s32.totalorder 1, %s18
      %p173 = scmp.lt.s32.totalorder %s18, 3
      %p174 = pnand %p172, %p173
      %p175 = pneg %p174
      // Predicated region
      $region9: #{tpu_custom_call.1} parent=5 // pred_check
        _
      $region10: #{tpu_custom_call.1} parent=5 // pred_check_branch
        %177 = sbr.rel (%p174) target = $region12
      $region11: #{tpu_custom_call.1} parent=5 // pred_region
        %s178 = ssub.s32 %s18, 1
        // Predicated region
        $region13: #{tpu_custom_call.1} parent=11 // pred_check
          %p179 = pneg %p65
        $region14: #{tpu_custom_call.1} parent=11 // pred_check_branch
          %181 = sbr.rel (%p179) target = $region16
        $region15: #{tpu_custom_call.1} parent=11 // pred_region
          _
        $region16: #{tpu_custom_call.1} parent=11 // pred_fallthru
          _
        // Predicated region
        $region17: #{tpu_custom_call.1} parent=11 // pred_check
          %p182 = pneg %p86
        $region18: #{tpu_custom_call.1} parent=11 // pred_check_branch
          %184 = sbr.rel (%p182) target = $region20
        $region19: #{tpu_custom_call.1} parent=11 // pred_region
          _
        $region20: #{tpu_custom_call.1} parent=11 // pred_fallthru
          _
      $region12: #{tpu_custom_call.1} parent=5 // pred_fallthru
        _
      %p185 = scmp.lt.s32.totalorder %s18, 2
      // Predicated region
      $region21: #{tpu_custom_call.1} parent=5 // pred_check
        %p186 = pneg %p185
      $region22: #{tpu_custom_call.1} parent=5 // pred_check_branch
        %188 = sbr.rel (%p186) target = $region24
      $region23: #{tpu_custom_call.1} parent=5 // pred_region
        // Predicated region
        $region25: #{tpu_custom_call.1} parent=23 // pred_check
          %p189 = pneg %p38
        $region26: #{tpu_custom_call.1} parent=23 // pred_check_branch
          %191 = sbr.rel (%p189) target = $region28
        $region27: #{tpu_custom_call.1} parent=23 // pred_region
          %s192 = smul.u32 16, %s18
          %p193 = scmp.lt.s32.totalorder %s192, 31
          %s194 = scalar_select %p193, %s192, 31
          %s195 = smul.addr %s194, 8
          %s196 = scalar_lea.vmem %s0, %s195
          %s197 = smul.u32 16, %s18
        $region28: #{tpu_custom_call.1} parent=23 // pred_fallthru
          _
      $region24: #{tpu_custom_call.1} parent=5 // pred_fallthru
        _
      %p198 = scmp.le.s32.totalorder 1, %s18
      %p199 = scmp.lt.s32.totalorder %s18, 3
      %p200 = pnand %p198, %p199
      %p201 = pneg %p200
      // Predicated region
      $region29: #{tpu_custom_call.1} parent=5 // pred_check
        _
      $region30: #{tpu_custom_call.1} parent=5 // pred_check_branch
        %203 = sbr.rel (%p200) target = $region32
      $region31: #{tpu_custom_call.1} parent=5 // pred_region
        %s204 = ssub.s32 %s18, 1
        %s205 = smul.u32 16, %s23
        %p206 = scmp.lt.s32.totalorder %s205, 31
        %s207 = scalar_select %p206, %s205, 31
        %s208 = smul.addr %s207, 8
        %s209 = scalar_lea.vmem %s0, %s208
        %p210 = pneg %p44
        %p211 = pneg %p41
        %p212 = pneg %p65
        %p213 = pneg %p62
        %p214 = pneg %p86
        %p215 = pneg %p83
        %p216 = pneg %p112
        %p217 = pneg %p109
        %s218 = sand.u32 %s99, 1
        %s219 = scalar_lea.sflag [#allocation3], %s218
        %s220 = sand.u32 %s99, 1
        %s221 = smul.addr %s220, 128
        %s222 = scalar_lea.vmem [#allocation2], %s221
        %p223 = pneg %p138
        %p224 = pneg %p135
        %s225 = smul.u32 16, %s23
        %p226 = scmp.lt.s32.totalorder %s225, 31
        %s227 = scalar_select %p226, %s225, 31
        %s228 = smul.addr %s227, 8
        %s229 = scalar_lea.vmem %s4, %s228
        %p230 = pneg %p164
        %p231 = pneg %p161
        %s232 = sand.u32 %s151, 1
        %s233 = scalar_lea.sflag [#allocation5], %s232
        %s234 = sand.u32 %s151, 1
        %s235 = smul.addr %s234, 2
        %s236 = scalar_lea.vmem [#allocation4], %s235
        %s237 = smul.u32 16, %s23
        %p238 = scmp.lt.s32.totalorder %s237, 31
        %s239 = scalar_select %p238, %s237, 31
        %s240 = smul.addr %s239, 8
        %s241 = scalar_lea.vmem %s0, %s240
        %s242 = smul.u32 16, %s23
        %s243 = smul.u32 16, %s23
        %s244 = smul.u32 16, %s23
        %p245 = scmp.lt.s32.totalorder %s244, 31
        %s246 = scalar_select %p245, %s244, 31
        %s247 = smul.addr %s246, 8
        %s248 = scalar_lea.vmem %s4, %s247
        %s249 = smul.u32 16, %s23
        %v251 = vld [vmem:[%s241] sm:$0xff]
        %v252 = vld [vmem:[%s241 + $0x8] sm:$0xff]
        %v253 = vld [vmem:[%s241 + $0x10] sm:$0xff]
        %v254 = vld [vmem:[%s241 + $0x18] sm:$0xff]
        %v255 = vld [vmem:[%s241 + $0x20] sm:$0xff]
        %v256 = vld [vmem:[%s241 + $0x28] sm:$0xff]
        %v257 = vld [vmem:[%s241 + $0x30] sm:$0xff]
        %v258 = vld [vmem:[%s241 + $0x38] sm:$0xff]
        %v259 = vld [vmem:[%s241 + $0x40] sm:$0xff]
        %v260 = vld [vmem:[%s241 + $0x48] sm:$0xff]
        %v261 = vld [vmem:[%s241 + $0x50] sm:$0xff]
        %v262 = vld [vmem:[%s241 + $0x58] sm:$0xff]
        %v263 = vld [vmem:[%s241 + $0x60] sm:$0xff]
        %v264 = vld [vmem:[%s241 + $0x68] sm:$0xff]
        %v265 = vld [vmem:[%s241 + $0x70] sm:$0xff]
        %v266 = vld [vmem:[%s241 + $0x78] sm:$0xff]
        %v267 = vpack.c.bf16 %v252, %v251
        %v268 = vpack.c.bf16 %v254, %v253
        %v269 = vpack.c.bf16 %v256, %v255
        %v270 = vpack.c.bf16 %v258, %v257
        %v271 = vpack.c.bf16 %v260, %v259
        %v272 = vpack.c.bf16 %v262, %v261
        %v273 = vpack.c.bf16 %v264, %v263
        %v274 = vpack.c.bf16 %v266, %v265
        %v275 = vld [vmem:[%s1] sm:$0xff]
        %v276 = vld [vmem:[%s1 + $0x8] sm:$0xff]
        %v277 = vld [vmem:[%s1 + $0x10] sm:$0xff]
        %v278 = vld [vmem:[%s1 + $0x18] sm:$0xff]
        %v283 = vunpack.c.l.b16 %v275
        %v284 = vunpack.c.h.b16 %v275
        %v285 = vunpack.c.l.b16 %v276
        %v286 = vunpack.c.h.b16 %v276
        %v287 = vunpack.c.l.b16 %v277
        %v288 = vunpack.c.h.b16 %v277
        %v289 = vunpack.c.l.b16 %v278
        %v290 = vunpack.c.h.b16 %v278
        %v291 = vpack.c.b16 %v285, %v283
        %v292 = vpack.c.b16 %v286, %v284
        %v293 = vpack.c.b16 %v289, %v287
        %v294 = vpack.c.b16 %v290, %v288
        %vm299 = vcmask 261120
        %v301 = vsel %vm299, %v267, 0
        %v304 = vsel %vm299, %v268, 0
        %v307 = vsel %vm299, %v269, 0
        %v310 = vsel %vm299, %v270, 0
        %v313 = vsel %vm299, %v271, 0
        %v316 = vsel %vm299, %v272, 0
        %v319 = vsel %vm299, %v273, 0
        %v322 = vsel %vm299, %v274, 0
        %324 = vmatprep.subr.bf16.mxu0 0
        %325 = vmatpush1.bf16.msra.mxu0 0
        %326 = vmatprep.subr.bf16.mxu0 0
        %327 = vmatpush1.bf16.msra.mxu0 0
        %328 = vmatprep.subr.bf16.mxu0 0
        %329 = vmatpush1.bf16.msra.mxu0 0
        %330 = vmatprep.subr.bf16.mxu0 0
        %331 = vmatpush1.bf16.msra.mxu0 0
        %332 = vmatprep.subr.bf16.mxu0 0
        %333 = vmatpush1.bf16.msra.mxu0 0
        %334 = vmatprep.subr.bf16.mxu0 0
        %335 = vmatpush1.bf16.msra.mxu0 0
        %336 = vmatprep.subr.bf16.mxu0 %v294
        %337 = vmatpush1.bf16.msra.mxu0 %v293
        %338 = vmatprep.subr.bf16.mxu0 %v292
        %339 = vmatpush1.bf16.msra.mxu0 %v291
        %340 = vmatprep.subr.bf16.mxu0 0
        %341 = vmatpush2.bf16.msra.mxu0 0
        %342 = vmatprep.subr.bf16.mxu0 0
        %343 = vmatpush2.bf16.msra.mxu0 0
        %344 = vmatprep.subr.bf16.mxu0 0
        %345 = vmatpush2.bf16.msra.mxu0 0
        %346 = vmatprep.subr.bf16.mxu0 0
        %347 = vmatpush2.bf16.msra.mxu0 0
        %348 = vmatprep.subr.bf16.mxu0 0
        %349 = vmatpush2.bf16.msra.mxu0 0
        %350 = vmatprep.subr.bf16.mxu0 0
        %351 = vmatpush2.bf16.msra.mxu0 0
        %352 = vmatprep.subr.bf16.mxu0 0
        %353 = vmatpush2.bf16.msra.mxu0 0
        %354 = vmatprep.subr.bf16.mxu0 0
        %355 = vmatpush2.bf16.msra.mxu0 0
        %356 = vmatprep.mubr.bf16.mxu0 0
        %357 = vmatmul.mubr.bf16.gmra.mxu0 %v301
        %v358 = vpop.f32.mrf.mxu0
        %v359 = vadd.f32 0.0, %v358
        %v360 = vpop.f32.mrf.mxu0
        %v361 = vadd.f32 0.0, %v360
        %v362 = vpop.f32.mrf.mxu0
        %v363 = vadd.f32 0.0, %v362
        %v364 = vpop.f32.mrf.mxu0
        %v365 = vadd.f32 0.0, %v364
        %366 = vmatprep.mubr.bf16.mxu0 0
        %367 = vmatmul.mubr.bf16.gmra.mxu0 %v304
        %v368 = vpop.f32.mrf.mxu0
        %v369 = vadd.f32 0.0, %v368
        %v370 = vpop.f32.mrf.mxu0
        %v371 = vadd.f32 0.0, %v370
        %v372 = vpop.f32.mrf.mxu0
        %v373 = vadd.f32 0.0, %v372
        %v374 = vpop.f32.mrf.mxu0
        %v375 = vadd.f32 0.0, %v374
        %376 = vmatprep.mubr.bf16.mxu0 0
        %377 = vmatmul.mubr.bf16.gmra.mxu0 %v307
        %v378 = vpop.f32.mrf.mxu0
        %v379 = vadd.f32 0.0, %v378
        %v380 = vpop.f32.mrf.mxu0
        %v381 = vadd.f32 0.0, %v380
        %v382 = vpop.f32.mrf.mxu0
        %v383 = vadd.f32 0.0, %v382
        %v384 = vpop.f32.mrf.mxu0
        %v385 = vadd.f32 0.0, %v384
        %386 = vmatprep.mubr.bf16.mxu0 0
        %387 = vmatmul.mubr.bf16.gmra.mxu0 %v310
        %v388 = vpop.f32.mrf.mxu0
        %v389 = vadd.f32 0.0, %v388
        %v390 = vpop.f32.mrf.mxu0
        %v391 = vadd.f32 0.0, %v390
        %v392 = vpop.f32.mrf.mxu0
        %v393 = vadd.f32 0.0, %v392
        %v394 = vpop.f32.mrf.mxu0
        %v395 = vadd.f32 0.0, %v394
        %396 = vmatprep.mubr.bf16.mxu0 0
        %397 = vmatmul.mubr.bf16.gmra.mxu0 %v313
        %v398 = vpop.f32.mrf.mxu0
        %v399 = vadd.f32 0.0, %v398
        %v400 = vpop.f32.mrf.mxu0
        %v401 = vadd.f32 0.0, %v400
        %v402 = vpop.f32.mrf.mxu0
        %v403 = vadd.f32 0.0, %v402
        %v404 = vpop.f32.mrf.mxu0
        %v405 = vadd.f32 0.0, %v404
        %406 = vmatprep.mubr.bf16.mxu0 0
        %407 = vmatmul.mubr.bf16.gmra.mxu0 %v316
        %v408 = vpop.f32.mrf.mxu0
        %v409 = vadd.f32 0.0, %v408
        %v410 = vpop.f32.mrf.mxu0
        %v411 = vadd.f32 0.0, %v410
        %v412 = vpop.f32.mrf.mxu0
        %v413 = vadd.f32 0.0, %v412
        %v414 = vpop.f32.mrf.mxu0
        %v415 = vadd.f32 0.0, %v414
        %416 = vmatprep.mubr.bf16.mxu0 0
        %417 = vmatmul.mubr.bf16.gmra.mxu0 %v319
        %v418 = vpop.f32.mrf.mxu0
        %v419 = vadd.f32 0.0, %v418
        %v420 = vpop.f32.mrf.mxu0
        %v421 = vadd.f32 0.0, %v420
        %v422 = vpop.f32.mrf.mxu0
        %v423 = vadd.f32 0.0, %v422
        %v424 = vpop.f32.mrf.mxu0
        %v425 = vadd.f32 0.0, %v424
        %426 = vmatprep.mubr.bf16.mxu0 0
        %427 = vmatmul.mubr.bf16.gmra.mxu0 %v322
        %v428 = vpop.f32.mrf.mxu0
        %v429 = vadd.f32 0.0, %v428
        %v430 = vpop.f32.mrf.mxu0
        %v431 = vadd.f32 0.0, %v430
        %v432 = vpop.f32.mrf.mxu0
        %v433 = vadd.f32 0.0, %v432
        %v434 = vpop.f32.mrf.mxu0
        %v435 = vadd.f32 0.0, %v434
        %436 = vdwg.mxu0
        %v437 = vpack.c.bf16 %v363, %v359
        %v438 = vpack.c.bf16 %v365, %v361
        %v439 = vpack.c.bf16 %v373, %v369
        %v440 = vpack.c.bf16 %v375, %v371
        %v441 = vpack.c.bf16 %v383, %v379
        %v442 = vpack.c.bf16 %v385, %v381
        %v443 = vpack.c.bf16 %v393, %v389
        %v444 = vpack.c.bf16 %v395, %v391
        %v445 = vpack.c.bf16 %v403, %v399
        %v446 = vpack.c.bf16 %v405, %v401
        %v447 = vpack.c.bf16 %v413, %v409
        %v448 = vpack.c.bf16 %v415, %v411
        %v449 = vpack.c.bf16 %v423, %v419
        %v450 = vpack.c.bf16 %v425, %v421
        %v451 = vpack.c.bf16 %v433, %v429
        %v452 = vpack.c.bf16 %v435, %v431
        %v469 = vunpack.c.l.b16 %v437
        %v470 = vunpack.c.l.b16 %v438
        %v471 = vunpack.c.h.b16 %v437
        %v472 = vunpack.c.h.b16 %v438
        %v473 = vunpack.c.l.b16 %v439
        %v474 = vunpack.c.l.b16 %v440
        %v475 = vunpack.c.h.b16 %v439
        %v476 = vunpack.c.h.b16 %v440
        %v477 = vunpack.c.l.b16 %v441
        %v478 = vunpack.c.l.b16 %v442
        %v479 = vunpack.c.h.b16 %v441
        %v480 = vunpack.c.h.b16 %v442
        %v481 = vunpack.c.l.b16 %v443
        %v482 = vunpack.c.l.b16 %v444
        %v483 = vunpack.c.h.b16 %v443
        %v484 = vunpack.c.h.b16 %v444
        %v485 = vunpack.c.l.b16 %v445
        %v486 = vunpack.c.l.b16 %v446
        %v487 = vunpack.c.h.b16 %v445
        %v488 = vunpack.c.h.b16 %v446
        %v489 = vunpack.c.l.b16 %v447
        %v490 = vunpack.c.l.b16 %v448
        %v491 = vunpack.c.h.b16 %v447
        %v492 = vunpack.c.h.b16 %v448
        %v493 = vunpack.c.l.b16 %v449
        %v494 = vunpack.c.l.b16 %v450
        %v495 = vunpack.c.h.b16 %v449
        %v496 = vunpack.c.h.b16 %v450
        %v497 = vunpack.c.l.b16 %v451
        %v498 = vunpack.c.l.b16 %v452
        %v499 = vunpack.c.h.b16 %v451
        %v500 = vunpack.c.h.b16 %v452
        %v501 = vpack.c.b16 %v470, %v469
        %v502 = vpack.c.b16 %v472, %v471
        %v503 = vpack.c.b16 %v474, %v473
        %v504 = vpack.c.b16 %v476, %v475
        %v505 = vpack.c.b16 %v478, %v477
        %v506 = vpack.c.b16 %v480, %v479
        %v507 = vpack.c.b16 %v482, %v481
        %v508 = vpack.c.b16 %v484, %v483
        %v509 = vpack.c.b16 %v486, %v485
        %v510 = vpack.c.b16 %v488, %v487
        %v511 = vpack.c.b16 %v490, %v489
        %v512 = vpack.c.b16 %v492, %v491
        %v513 = vpack.c.b16 %v494, %v493
        %v514 = vpack.c.b16 %v496, %v495
        %v515 = vpack.c.b16 %v498, %v497
        %v516 = vpack.c.b16 %v500, %v499
        %533 = vst [vmem:[%s222] sm:$0xff] %v501
        %534 = vst [vmem:[%s222 + $0x8] sm:$0xff] %v502
        %535 = vst [vmem:[%s222 + $0x10] sm:$0xff] %v503
        %536 = vst [vmem:[%s222 + $0x18] sm:$0xff] %v504
        %537 = vst [vmem:[%s222 + $0x20] sm:$0xff] %v505
        %538 = vst [vmem:[%s222 + $0x28] sm:$0xff] %v506
        %539 = vst [vmem:[%s222 + $0x30] sm:$0xff] %v507
        %540 = vst [vmem:[%s222 + $0x38] sm:$0xff] %v508
        %541 = vst [vmem:[%s222 + $0x40] sm:$0xff] %v509
        %542 = vst [vmem:[%s222 + $0x48] sm:$0xff] %v510
        %543 = vst [vmem:[%s222 + $0x50] sm:$0xff] %v511
        %544 = vst [vmem:[%s222 + $0x58] sm:$0xff] %v512
        %545 = vst [vmem:[%s222 + $0x60] sm:$0xff] %v513
        %546 = vst [vmem:[%s222 + $0x68] sm:$0xff] %v514
        %547 = vst [vmem:[%s222 + $0x70] sm:$0xff] %v515
        %548 = vst [vmem:[%s222 + $0x78] sm:$0xff] %v516
        %v549 = vld [vmem:[%s2] sm:$0xff]
        %v550 = vld [vmem:[%s2 + $0x8] sm:$0xff]
        %v551 = vld [vmem:[%s2 + $0x10] sm:$0xff]
        %v552 = vld [vmem:[%s2 + $0x18] sm:$0xff]
        %v554 = vsel %vm299, %v251, 0
        %v557 = vsel %vm299, %v252, 0
        %v560 = vsel %vm299, %v253, 0
        %v563 = vsel %vm299, %v254, 0
        %v566 = vsel %vm299, %v255, 0
        %v569 = vsel %vm299, %v256, 0
        %v572 = vsel %vm299, %v257, 0
        %v575 = vsel %vm299, %v258, 0
        %v578 = vsel %vm299, %v259, 0
        %v581 = vsel %vm299, %v260, 0
        %v584 = vsel %vm299, %v261, 0
        %v587 = vsel %vm299, %v262, 0
        %v590 = vsel %vm299, %v263, 0
        %v593 = vsel %vm299, %v264, 0
        %v596 = vsel %vm299, %v265, 0
        %v599 = vsel %vm299, %v266, 0
        %601 = vmatprep.subr.mxu0 0.0
        %602 = vmatpush1.msra.mxu0 0.0
        %603 = vmatprep.subr.mxu0 0.0
        %604 = vmatpush1.msra.mxu0 0.0
        %605 = vmatprep.subr.mxu0 0.0
        %606 = vmatpush1.msra.mxu0 0.0
        %607 = vmatprep.subr.mxu0 0.0
        %608 = vmatpush1.msra.mxu0 0.0
        %609 = vmatprep.subr.mxu0 0.0
        %610 = vmatpush1.msra.mxu0 0.0
        %611 = vmatprep.subr.mxu0 0.0
        %612 = vmatpush1.msra.mxu0 0.0
        %613 = vmatprep.subr.mxu0 0.0
        %614 = vmatpush1.msra.mxu0 0.0
        %615 = vmatprep.subr.mxu0 0.0
        %616 = vmatpush1.msra.mxu0 0.0
        %617 = vmatprep.subr.mxu0 0.0
        %618 = vmatpush1.msra.mxu0 0.0
        %619 = vmatprep.subr.mxu0 0.0
        %620 = vmatpush1.msra.mxu0 0.0
        %621 = vmatprep.subr.mxu0 0.0
        %622 = vmatpush1.msra.mxu0 0.0
        %623 = vmatprep.subr.mxu0 0.0
        %624 = vmatpush1.msra.mxu0 0.0
        %625 = vmatprep.subr.mxu0 0.0
        %626 = vmatpush1.msra.mxu0 %v552
        %627 = vmatprep.subr.mxu0 0.0
        %628 = vmatpush1.msra.mxu0 %v551
        %629 = vmatprep.subr.mxu0 0.0
        %630 = vmatpush1.msra.mxu0 %v550
        %631 = vmatprep.subr.mxu0 0.0
        %632 = vmatpush1.msra.mxu0 %v549
        %633 = vmatprep.subr.mxu0 0.0
        %634 = vmatpush2.msra.mxu0 0.0
        %635 = vmatprep.subr.mxu0 0.0
        %636 = vmatpush2.msra.mxu0 0.0
        %637 = vmatprep.subr.mxu0 0.0
        %638 = vmatpush2.msra.mxu0 0.0
        %639 = vmatprep.subr.mxu0 0.0
        %640 = vmatpush2.msra.mxu0 0.0
        %641 = vmatprep.subr.mxu0 0.0
        %642 = vmatpush2.msra.mxu0 0.0
        %643 = vmatprep.subr.mxu0 0.0
        %644 = vmatpush2.msra.mxu0 0.0
        %645 = vmatprep.subr.mxu0 0.0
        %646 = vmatpush2.msra.mxu0 0.0
        %647 = vmatprep.subr.mxu0 0.0
        %648 = vmatpush2.msra.mxu0 0.0
        %649 = vmatprep.subr.mxu0 0.0
        %650 = vmatpush2.msra.mxu0 0.0
        %651 = vmatprep.subr.mxu0 0.0
        %652 = vmatpush2.msra.mxu0 0.0
        %653 = vmatprep.subr.mxu0 0.0
        %654 = vmatpush2.msra.mxu0 0.0
        %655 = vmatprep.subr.mxu0 0.0
        %656 = vmatpush2.msra.mxu0 0.0
        %657 = vmatprep.subr.mxu0 0.0
        %658 = vmatpush2.msra.mxu0 0.0
        %659 = vmatprep.subr.mxu0 0.0
        %660 = vmatpush2.msra.mxu0 0.0
        %661 = vmatprep.subr.mxu0 0.0
        %662 = vmatpush2.msra.mxu0 0.0
        %663 = vmatprep.subr.mxu0 0.0
        %664 = vmatpush2.msra.mxu0 0.0
        %665 = vmatprep.mubr.f32.mxu0 0.0
        %666 = vmatmul.mubr.f32.gmra.mxu0 %v554
        %v667 = vpop.f32.mrf.mxu0
        %v668 = vadd.f32 0.0, %v667
        %v669 = vpop.f32.mrf.mxu0
        %670 = vmatprep.mubr.f32.mxu0 0.0
        %671 = vmatmul.mubr.f32.gmra.mxu0 %v557
        %v672 = vpop.f32.mrf.mxu0
        %v673 = vadd.f32 0.0, %v672
        %v674 = vpop.f32.mrf.mxu0
        %675 = vmatprep.mubr.f32.mxu0 0.0
        %676 = vmatmul.mubr.f32.gmra.mxu0 %v560
        %v677 = vpop.f32.mrf.mxu0
        %v678 = vadd.f32 0.0, %v677
        %v679 = vpop.f32.mrf.mxu0
        %680 = vmatprep.mubr.f32.mxu0 0.0
        %681 = vmatmul.mubr.f32.gmra.mxu0 %v563
        %v682 = vpop.f32.mrf.mxu0
        %v683 = vadd.f32 0.0, %v682
        %v684 = vpop.f32.mrf.mxu0
        %685 = vmatprep.mubr.f32.mxu0 0.0
        %686 = vmatmul.mubr.f32.gmra.mxu0 %v566
        %v687 = vpop.f32.mrf.mxu0
        %v688 = vadd.f32 0.0, %v687
        %v689 = vpop.f32.mrf.mxu0
        %690 = vmatprep.mubr.f32.mxu0 0.0
        %691 = vmatmul.mubr.f32.gmra.mxu0 %v569
        %v692 = vpop.f32.mrf.mxu0
        %v693 = vadd.f32 0.0, %v692
        %v694 = vpop.f32.mrf.mxu0
        %695 = vmatprep.mubr.f32.mxu0 0.0
        %696 = vmatmul.mubr.f32.gmra.mxu0 %v572
        %v697 = vpop.f32.mrf.mxu0
        %v698 = vadd.f32 0.0, %v697
        %v699 = vpop.f32.mrf.mxu0
        %700 = vmatprep.mubr.f32.mxu0 0.0
        %701 = vmatmul.mubr.f32.gmra.mxu0 %v575
        %v702 = vpop.f32.mrf.mxu0
        %v703 = vadd.f32 0.0, %v702
        %v704 = vpop.f32.mrf.mxu0
        %705 = vmatprep.mubr.f32.mxu0 0.0
        %706 = vmatmul.mubr.f32.gmra.mxu0 %v578
        %v707 = vpop.f32.mrf.mxu0
        %v708 = vadd.f32 0.0, %v707
        %v709 = vpop.f32.mrf.mxu0
        %710 = vmatprep.mubr.f32.mxu0 0.0
        %711 = vmatmul.mubr.f32.gmra.mxu0 %v581
        %v712 = vpop.f32.mrf.mxu0
        %v713 = vadd.f32 0.0, %v712
        %v714 = vpop.f32.mrf.mxu0
        %715 = vmatprep.mubr.f32.mxu0 0.0
        %716 = vmatmul.mubr.f32.gmra.mxu0 %v584
        %v717 = vpop.f32.mrf.mxu0
        %v718 = vadd.f32 0.0, %v717
        %v719 = vpop.f32.mrf.mxu0
        %720 = vmatprep.mubr.f32.mxu0 0.0
        %721 = vmatmul.mubr.f32.gmra.mxu0 %v587
        %v722 = vpop.f32.mrf.mxu0
        %v723 = vadd.f32 0.0, %v722
        %v724 = vpop.f32.mrf.mxu0
        %725 = vmatprep.mubr.f32.mxu0 0.0
        %726 = vmatmul.mubr.f32.gmra.mxu0 %v590
        %v727 = vpop.f32.mrf.mxu0
        %v728 = vadd.f32 0.0, %v727
        %v729 = vpop.f32.mrf.mxu0
        %730 = vmatprep.mubr.f32.mxu0 0.0
        %731 = vmatmul.mubr.f32.gmra.mxu0 %v593
        %v732 = vpop.f32.mrf.mxu0
        %v733 = vadd.f32 0.0, %v732
        %v734 = vpop.f32.mrf.mxu0
        %735 = vmatprep.mubr.f32.mxu0 0.0
        %736 = vmatmul.mubr.f32.gmra.mxu0 %v596
        %v737 = vpop.f32.mrf.mxu0
        %v738 = vadd.f32 0.0, %v737
        %v739 = vpop.f32.mrf.mxu0
        %740 = vmatprep.mubr.f32.mxu0 0.0
        %741 = vmatmul.mubr.f32.gmra.mxu0 %v599
        %v742 = vpop.f32.mrf.mxu0
        %v743 = vadd.f32 0.0, %v742
        %v744 = vpop.f32.mrf.mxu0
        %745 = vdwg.mxu0
        %762 = vrot.lane.b32.xlu0 %v668, 126
        %v763 = vpop.permute.xlu0 %762
        %764 = vrot.lane.b32.xlu0 %v673, 126
        %v765 = vpop.permute.xlu0 %764
        %766 = vrot.lane.b32.xlu0 %v678, 126
        %v767 = vpop.permute.xlu0 %766
        %768 = vrot.lane.b32.xlu0 %v683, 126
        %v769 = vpop.permute.xlu0 %768
        %770 = vrot.lane.b32.xlu0 %v688, 126
        %v771 = vpop.permute.xlu0 %770
        %772 = vrot.lane.b32.xlu0 %v693, 126
        %v773 = vpop.permute.xlu0 %772
        %774 = vrot.lane.b32.xlu0 %v698, 126
        %v775 = vpop.permute.xlu0 %774
        %776 = vrot.lane.b32.xlu0 %v703, 126
        %v777 = vpop.permute.xlu0 %776
        %778 = vrot.lane.b32.xlu0 %v708, 126
        %v779 = vpop.permute.xlu0 %778
        %780 = vrot.lane.b32.xlu0 %v713, 126
        %v781 = vpop.permute.xlu0 %780
        %782 = vrot.lane.b32.xlu0 %v718, 126
        %v783 = vpop.permute.xlu0 %782
        %784 = vrot.lane.b32.xlu0 %v723, 126
        %v785 = vpop.permute.xlu0 %784
        %786 = vrot.lane.b32.xlu0 %v728, 126
        %v787 = vpop.permute.xlu0 %786
        %788 = vrot.lane.b32.xlu0 %v733, 126
        %v789 = vpop.permute.xlu0 %788
        %790 = vrot.lane.b32.xlu0 %v738, 126
        %v791 = vpop.permute.xlu0 %790
        %792 = vrot.lane.b32.xlu0 %v743, 126
        %v793 = vpop.permute.xlu0 %792
        %vm810 = vcmask 15360
        %811 = vst.msk [vmem:[%s248] sm:$0xff] %vm810, %v763
        %812 = vst.msk [vmem:[%s248 + $0x8] sm:$0xff] %vm810, %v765
        %813 = vst.msk [vmem:[%s248 + $0x10] sm:$0xff] %vm810, %v767
        %814 = vst.msk [vmem:[%s248 + $0x18] sm:$0xff] %vm810, %v769
        %815 = vst.msk [vmem:[%s248 + $0x20] sm:$0xff] %vm810, %v771
        %816 = vst.msk [vmem:[%s248 + $0x28] sm:$0xff] %vm810, %v773
        %817 = vst.msk [vmem:[%s248 + $0x30] sm:$0xff] %vm810, %v775
        %818 = vst.msk [vmem:[%s248 + $0x38] sm:$0xff] %vm810, %v777
        %819 = vst.msk [vmem:[%s248 + $0x40] sm:$0xff] %vm810, %v779
        %820 = vst.msk [vmem:[%s248 + $0x48] sm:$0xff] %vm810, %v781
        %821 = vst.msk [vmem:[%s248 + $0x50] sm:$0xff] %vm810, %v783
        %822 = vst.msk [vmem:[%s248 + $0x58] sm:$0xff] %vm810, %v785
        %823 = vst.msk [vmem:[%s248 + $0x60] sm:$0xff] %vm810, %v787
        %824 = vst.msk [vmem:[%s248 + $0x68] sm:$0xff] %vm810, %v789
        %825 = vst.msk [vmem:[%s248 + $0x70] sm:$0xff] %vm810, %v791
        %826 = vst.msk [vmem:[%s248 + $0x78] sm:$0xff] %vm810, %v793
        %827 = vxpose.xlu0.b32.start [1/16] %v668, 128
        %828 = vxpose.xlu0.b32.cont [2/16] %v673, 128
        %829 = vxpose.xlu0.b32.cont [3/16] %v678, 128
        %830 = vxpose.xlu0.b32.cont [4/16] %v683, 128
        %831 = vxpose.xlu0.b32.cont [5/16] %v688, 128
        %832 = vxpose.xlu0.b32.cont [6/16] %v693, 128
        %833 = vxpose.xlu0.b32.cont [7/16] %v698, 128
        %834 = vxpose.xlu0.b32.cont [8/16] %v703, 128
        %835 = vxpose.xlu0.b32.cont [9/16] %v708, 128
        %836 = vxpose.xlu0.b32.cont [10/16] %v713, 128
        %837 = vxpose.xlu0.b32.cont [11/16] %v718, 128
        %838 = vxpose.xlu0.b32.cont [12/16] %v723, 128
        %839 = vxpose.xlu0.b32.cont [13/16] %v728, 128
        %840 = vxpose.xlu0.b32.cont [14/16] %v733, 128
        %841 = vxpose.xlu0.b32.cont [15/16] %v738, 128
        %842 = vxpose.xlu0.b32.end [16/16] %v743, 128
        %v843 = vpop.trf.xlu0
        %v844 = vpop.trf.xlu0
        %v845 = vpop.trf.xlu0
        %v846 = vpop.trf.xlu0
        %v847 = vpop.trf.xlu0
        %v848 = vpop.trf.xlu0
        %v849 = vpop.trf.xlu0
        %v850 = vpop.trf.xlu0
        %v851 = vpop.trf.xlu0
        %v852 = vpop.trf.xlu0
        %v853 = vpop.trf.xlu0
        %v854 = vpop.trf.xlu0
        %v855 = vpop.trf.xlu0
        %v856 = vpop.trf.xlu0
        %v857 = vpop.trf.xlu0
        %v858 = vpop.trf.xlu0
        %859 = vst [vmem:[%s236] sm:$0x3] %v843
        %s860 = sand.u32 %s99, 1
        %s861 = scalar_lea.sflag [#allocation3], %s860
        %s862 = sand.u32 %s99, 1
        %s863 = smul.addr %s862, 128
        %s864 = scalar_lea.vmem [#allocation2], %s863
        %s865 = smul.u32 16, %s23
        %p866 = scmp.lt.s32.totalorder %s865, 31
        %s867 = scalar_select %p866, %s865, 31
        %s868 = smul.addr %s867, 8
        %s869 = scalar_lea.vmem %s4, %s868
        %s870 = sand.u32 %s151, 1
        %s871 = scalar_lea.sflag [#allocation5], %s870
        %s872 = sand.u32 %s151, 1
        %s873 = smul.addr %s872, 2
        %s874 = scalar_lea.vmem [#allocation4], %s873
        // Predicated region
        $region33: #{tpu_custom_call.1} parent=31 // pred_check
          %p875 = pneg %p109
        $region34: #{tpu_custom_call.1} parent=31 // pred_check_branch
          %877 = sbr.rel (%p875) target = $region36
        $region35: #{tpu_custom_call.1} parent=31 // pred_region
          %s878 = smul.u32 16, %s23
          %s880 = ssub.s32 2048, 2048
          %881 = vsyncadd %s861, %s880
          %s882 = smul.addr %s878, 2
          %s883 = smul.addr %s882, 64
          %s884 = scalar_lea.hbm %s3, %s883
          %s885 = sshll.u32 %s864, 4
          %s886 = int_to_ptr.vmem [resolvable:$true] %s885
          %891 = dma.vmem_to_hbm [thread:$0]  %s886, 2048, %s884, %s861, 128, 128, 8
        $region36: #{tpu_custom_call.1} parent=31 // pred_fallthru
          _
        // Predicated region
        $region37: #{tpu_custom_call.1} parent=31 // pred_check
          %p892 = pneg %p135
        $region38: #{tpu_custom_call.1} parent=31 // pred_check_branch
          %894 = sbr.rel (%p892) target = $region40
        $region39: #{tpu_custom_call.1} parent=31 // pred_region
          %s895 = smul.u32 16, %s23
        $region40: #{tpu_custom_call.1} parent=31 // pred_fallthru
          _
        // Predicated region
        $region41: #{tpu_custom_call.1} parent=31 // pred_check
          %p896 = pneg %p161
        $region42: #{tpu_custom_call.1} parent=31 // pred_check_branch
          %898 = sbr.rel (%p896) target = $region44
        $region43: #{tpu_custom_call.1} parent=31 // pred_region
          %s900 = ssub.s32 32, 32
          %901 = vsyncadd %s871, %s900
          %s902 = smul.addr %s23, 32
          %s903 = scalar_lea.hbm %s5, %s902
          %s905 = sshll.u32 %s874, 4
          %s906 = int_to_ptr.vmem [resolvable:$true] %s905
          %908 = dma.vmem_to_hbm [thread:$0]  %s906, 32, %s903, %s871
        $region44: #{tpu_custom_call.1} parent=31 // pred_fallthru
          _
      $region32: #{tpu_custom_call.1} parent=5 // pred_fallthru
        _
      %p909 = scmp.le.s32.totalorder 2, %s18
      // Predicated region
      $region45: #{tpu_custom_call.1} parent=5 // pred_check
        %p910 = pneg %p909
      $region46: #{tpu_custom_call.1} parent=5 // pred_check_branch
        %912 = sbr.rel (%p910) target = $region48
      $region47: #{tpu_custom_call.1} parent=5 // pred_region
        %s913 = ssub.s32 %s18, 2
        // Predicated region
        $region49: #{tpu_custom_call.1} parent=47 // pred_check
          %p914 = pneg %p115
        $region50: #{tpu_custom_call.1} parent=47 // pred_check_branch
          %916 = sbr.rel (%p914) target = $region52
        $region51: #{tpu_custom_call.1} parent=47 // pred_region
          %s917 = sand.u32 %s100, 1
          %s918 = scalar_lea.sflag [#allocation3], %s917
          %s919 = sand.u32 %s100, 1
          %s920 = smul.addr %s919, 128
          %s921 = scalar_lea.vmem [#allocation2], %s920
          %922 = dma.done %s918, 2048
        $region52: #{tpu_custom_call.1} parent=47 // pred_fallthru
          _
        // Predicated region
        $region53: #{tpu_custom_call.1} parent=47 // pred_check
          %p923 = pneg %p141
        $region54: #{tpu_custom_call.1} parent=47 // pred_check_branch
          %925 = sbr.rel (%p923) target = $region56
        $region55: #{tpu_custom_call.1} parent=47 // pred_region
          %s926 = smul.u32 16, %s24
          %p927 = scmp.lt.s32.totalorder %s926, 31
          %s928 = scalar_select %p927, %s926, 31
          %s929 = smul.addr %s928, 8
          %s930 = scalar_lea.vmem %s4, %s929
        $region56: #{tpu_custom_call.1} parent=47 // pred_fallthru
          _
        // Predicated region
        $region57: #{tpu_custom_call.1} parent=47 // pred_check
          %p931 = pneg %p167
        $region58: #{tpu_custom_call.1} parent=47 // pred_check_branch
          %933 = sbr.rel (%p931) target = $region60
        $region59: #{tpu_custom_call.1} parent=47 // pred_region
          %s934 = sand.u32 %s152, 1
          %s935 = scalar_lea.sflag [#allocation5], %s934
          %s936 = sand.u32 %s152, 1
          %s937 = smul.addr %s936, 2
          %s938 = scalar_lea.vmem [#allocation4], %s937
          %939 = dma.done %s935, 32
        $region60: #{tpu_custom_call.1} parent=47 // pred_fallthru
          _
      $region48: #{tpu_custom_call.1} parent=5 // pred_fallthru
        _
    $region6: #{tpu_custom_call.1} parent=1 // loop_footer
      %s22 = sadd.s32 1, %s18
    $region7: #{tpu_custom_call.1} parent=1 // loop_footer_branch
      %17 = sbr.rel target = $region3
    $region8: #{tpu_custom_call.1} parent=1 // loop_exit
      _
    %940 = vsyncpa [#allocation3], 1
    %s941 = scalar_lea.sflag [#allocation3], 1
    %942 = vsyncpa %s941, 1
    %943 = vsyncpa [#allocation5], 1
    %s944 = scalar_lea.sflag [#allocation5], 1
    %945 = vsyncpa %s944, 1

</llo_original>
